<compile_context>
chip_gen: v5e
topology: v5e:2x2
jax: 0.10.0
libtpu: 0.0.40
codegen_flags: <defaults>
</compile_context>

<pallas_src>
import math
import functools

import jax
import jax.numpy as jnp
from jax.experimental import pallas as pl
from jax.experimental.pallas import tpu as pltpu


def _filter_kernel(x_ref, w_ref, bias_ref, o_ref):
    # x_ref   : (TB, K_pad)      TB batch rows, conv+proj+transform folded contraction
    # w_ref   : (K_pad, d_out)   fully folded weight  W_big[s*d_in+i, c] = wt[i,c]*w_eff[s,c]
    # bias_ref: (1, d_out)       fully folded bias
    # o_ref   : (TB, d_out)
    out = jnp.dot(x_ref[...], w_ref[...], preferred_element_type=jnp.float32)  # MXU
    o_ref[...] = (out + bias_ref[...]).astype(o_ref.dtype)


def _num_tensorcores():
    # v7x has 2 TensorCores per chip; v5e/v6e have 1.  Heuristic, safe fallback.
    try:
        kind = jax.devices()[0].device_kind.lower()
    except Exception:
        return 1
    return 2 if "v7" in kind else 1


def _pick_batch_tile(B, row_bytes, n_cores):
    """Pick the per-step batch tile TB (must divide B; multiple of 8 or == B)."""
    # Conservative per-buffer budget for the x block; with double buffering this
    # stays far below v7x's 32 MiB default scoped VMEM limit.
    vmem_budget = 8 << 20
    max_rows = max(8, vmem_budget // max(row_bytes, 1))

    if n_cores >= 2 and B >= 16 and B % (8 * n_cores) == 0:
        # Keep (a multiple of) n_cores parallel steps so every TensorCore has work.
        tb = B // n_cores
        while tb > max_rows and tb % 2 == 0 and (tb // 2) % 8 == 0:
            tb //= 2
        return tb

    # Single-TC chips (v5e/v6e): fewest, largest blocks — one grid step if it fits.
    if B <= max_rows and (B % 8 == 0 or B <= 8):
        return B
    tb = (max_rows // 8) * 8
    while tb >= 8:
        if B % tb == 0:
            return tb
        tb -= 8
    return B  # fallback: single full-batch block (valid: block == full dim)


def filter_forward(x, wt, bt, wc, bc, wp, bp, *, kernel_size, stride,
                   use_bf16_mxu=False):
    B, S, d_in = x.shape
    d_out = wt.shape[1]
    conv_feat = wp.shape[1]

    f32 = jnp.float32
    wt_f = wt.astype(f32)
    wc_f = wc.astype(f32)
    wp_f = wp.astype(f32)
    bt_f = bt.astype(f32)
    bc_f = bc.astype(f32)
    bp_f = bp.astype(f32)

    # ---- fold depthwise conv + proj_out into w_eff[s, c] (one segment_sum) ----
    pos = (jnp.arange(conv_feat)[:, None] * stride
           + jnp.arange(kernel_size)[None, :]).reshape(-1)                 # (F*K,)
    contrib = (wp_f[0][:, None, None] * wc_f[None, :, :]).reshape(-1, d_out)
    w_eff = jax.ops.segment_sum(contrib, pos, num_segments=S)              # (S, d_out)

    # Fully folded bias: bp + bc*sum(wp) + bt*sum_s w_eff[s,:]
    bias_full = (bp_f[0, 0]
                 + bc_f * jnp.sum(wp_f)
                 + bt_f * jnp.sum(w_eff, axis=0, keepdims=True))           # (1, d_out)

    # ---- fold w_eff into the transform weight: one big contraction ----
    K_raw = S * d_in
    K_pad = ((K_raw + 127) // 128) * 128                                   # lane-dense x
    w_big = (w_eff[:, None, :] * wt_f[None, :, :]).reshape(K_raw, d_out)
    w_big = jnp.pad(w_big, ((0, K_pad - K_raw), (0, 0)))                   # (K_pad, d_out)

    x2d = x.astype(f32).reshape(B, K_raw)
    x2d = jnp.pad(x2d, ((0, 0), (0, K_pad - K_raw)))                       # (B, K_pad)

    if use_bf16_mxu:
        # Cast at the HBM boundary (halves x/W DMA bytes); accumulation stays f32.
        x2d = x2d.astype(jnp.bfloat16)
        w_big = w_big.astype(jnp.bfloat16)

    n_cores = _num_tensorcores()
    row_bytes = K_pad * x2d.dtype.itemsize
    TB = _pick_batch_tile(B, row_bytes, n_cores)
    nb = B // TB if B % TB == 0 else 1
    if nb == 1:
        TB = B

    out2d = pl.pallas_call(
        _filter_kernel,
        out_shape=jax.ShapeDtypeStruct((B, d_out), x.dtype),
        grid_spec=pltpu.PrefetchScalarGridSpec(
            num_scalar_prefetch=0,
            grid=(nb,),
            in_specs=[
                pl.BlockSpec((TB, K_pad), lambda b: (b, 0)),     # x (flattened)
                pl.BlockSpec((K_pad, d_out), lambda b: (0, 0)),  # folded weight
                pl.BlockSpec((1, d_out), lambda b: (0, 0)),      # folded bias
            ],
            out_specs=pl.BlockSpec((TB, d_out), lambda b: (b, 0)),
        ),
        compiler_params=pltpu.CompilerParams(
            dimension_semantics=("parallel",)),
    )(x2d, w_big, bias_full)

    return out2d[:, None, :]                                      # (B, 1, d_out)


def filter_reference(x, wt, bt, wc, bc, wp, bp, *, kernel_size, stride):
    # Pure-JAX reference replicating the PyTorch forward.
    h = jnp.einsum("bsi,io->bso", x, wt) + bt                     # Linear
    conv_feat = wp.shape[1]
    rows = []
    for f in range(conv_feat):                                    # depthwise Conv1d
        win = h[:, f * stride:f * stride + kernel_size, :]        # (B, K, d_out)
        rows.append(jnp.sum(win * wc[None, :, :], axis=1) + bc)   # (B, d_out)
    agg = jnp.stack(rows, axis=1)                                 # (B, conv_feat, d_out)
    out = jnp.einsum("bfo,f->bo", agg, wp[0]) + bp[0, 0]          # proj_out
    return out[:, None, :]                                        # (B, 1, d_out)


if __name__ == "__main__":
    # Module config (small; Filter defaults kernel=5, stride=5).
    B, seq_len, d_input, d_output = 16, 20, 16, 32
    ksize, stride = 5, 5
    conv_feat = math.floor((seq_len - ksize) / stride + 1)        # = 4

    key = jax.random.PRNGKey(0)
    kx, k1, k2, k3, k4, k5, k6 = jax.random.split(key, 7)

    x = jax.random.normal(kx, (B, seq_len, d_input), dtype=jnp.float32)

    # Deterministic synthetic parameters (shapes per nn.Module __init__).
    wt = jax.random.normal(k1, (d_input, d_output), dtype=jnp.float32) * (1.0 / math.sqrt(d_input))
    bt = jax.random.normal(k2, (1, d_output), dtype=jnp.float32) * 0.1
    # Conv1d(d_out, d_out, kernel=5, stride=5, groups=d_out): weight stored as (kernel, d_out).
    wc = jax.random.normal(k3, (ksize, d_output), dtype=jnp.float32) * (1.0 / math.sqrt(ksize))
    bc = jax.random.normal(k4, (1, d_output), dtype=jnp.float32) * 0.1
    # proj_out: Linear(conv_feat, 1) -> weight (1, conv_feat), bias (1,)
    wp = jax.random.normal(k5, (1, conv_feat), dtype=jnp.float32) * (1.0 / math.sqrt(conv_feat))
    bp = jax.random.normal(k6, (1, 1), dtype=jnp.float32) * 0.1

    out = filter_forward(x, wt, bt, wc, bc, wp, bp, kernel_size=ksize, stride=stride)
    out = jax.block_until_ready(out)

    ref = filter_reference(x, wt, bt, wc, bc, wp, bp, kernel_size=ksize, stride=stride)
    assert out.shape == (B, 1, d_output), out.shape
    assert jnp.allclose(out, ref, atol=1e-4, rtol=1e-4), (out, ref)

    print("KERNEL_OK")
</pallas_src>

<mosaic_0001>
module attributes {stable_mosaic.version = 11 : i64} {
  func.func @_filter_kernel(%arg0: i32, %arg1: memref<16x384xf32, #tpu.memory_space<vmem>>, %arg2: memref<384x32xf32, #tpu.memory_space<vmem>>, %arg3: memref<1x32xf32, #tpu.memory_space<vmem>>, %arg4: memref<16x32xf32, #tpu.memory_space<vmem>>) attributes {dimension_semantics = [#tpu.dimension_semantics<parallel>], iteration_bounds = array<i64: 1>, scalar_prefetch = 0 : i64, scratch_operands = 0 : i64, tpu.core_type = #tpu.core_type<tc>, window_params = [{transform_indices = @transform_0, window_bounds = array<i64: 16, 384>}, {pipeline_mode = #tpu.pipeline_mode<synchronous>, transform_indices = @transform_1, window_bounds = array<i64: 384, 32>}, {pipeline_mode = #tpu.pipeline_mode<synchronous>, transform_indices = @transform_2, window_bounds = array<i64: 1, 32>}, {transform_indices = @transform_3, window_bounds = array<i64: 16, 32>}]} {
    %c0 = arith.constant 0 : index
    %c0_0 = arith.constant 0 : index
    %0 = vector.load %arg1[%c0, %c0_0] : memref<16x384xf32, #tpu.memory_space<vmem>>, vector<16x384xf32>
    %c0_1 = arith.constant 0 : index
    %c0_2 = arith.constant 0 : index
    %1 = vector.load %arg2[%c0_1, %c0_2] : memref<384x32xf32, #tpu.memory_space<vmem>>, vector<384x32xf32>
    %cst = arith.constant dense<0.000000e+00> : vector<16x32xf32>
    %2 = tpu.matmul %0, %1, %cst {dimension_numbers = #tpu.dot_dimension_numbers<[1], [0], [0], [1], [0, 0, 1, 1], [], []>} : vector<16x384xf32>, vector<384x32xf32>, vector<16x32xf32> -> vector<16x32xf32>
    %c0_3 = arith.constant 0 : index
    %c0_4 = arith.constant 0 : index
    %3 = vector.load %arg3[%c0_3, %c0_4] : memref<1x32xf32, #tpu.memory_space<vmem>>, vector<1x32xf32>
    %4 = vector.broadcast %3 : vector<1x32xf32> to vector<16x32xf32>
    %5 = arith.addf %2, %4 : vector<16x32xf32>
    %c0_5 = arith.constant 0 : index
    %c0_6 = arith.constant 0 : index
    %6 = vector.load %arg4[%c0_5, %c0_6] : memref<16x32xf32, #tpu.memory_space<vmem>>, vector<16x32xf32>
    tpu.vector_store %arg4[%c0_5, %c0_6], %5 {strides = array<i32>} : memref<16x32xf32, #tpu.memory_space<vmem>>, vector<16x32xf32>,
    return
  }
  func.func @transform_0(%arg0: i32) -> (i32, i32) {
    %c0_i32 = arith.constant 0 : i32
    %c0_i32_0 = arith.constant 0 : i32
    return %arg0, %c0_i32 : i32, i32
  }
  func.func @transform_1(%arg0: i32) -> (i32, i32) {
    %c0_i32 = arith.constant 0 : i32
    %c0_i32_0 = arith.constant 0 : i32
    %c0_i32_1 = arith.constant 0 : i32
    return %c0_i32, %c0_i32_0 : i32, i32
  }
  func.func @transform_2(%arg0: i32) -> (i32, i32) {
    %c0_i32 = arith.constant 0 : i32
    %c0_i32_0 = arith.constant 0 : i32
    %c0_i32_1 = arith.constant 0 : i32
    return %c0_i32, %c0_i32_0 : i32, i32
  }
  func.func @transform_3(%arg0: i32) -> (i32, i32) {
    %c0_i32 = arith.constant 0 : i32
    %c0_i32_0 = arith.constant 0 : i32
    return %arg0, %c0_i32 : i32, i32
  }
}

</mosaic_0001>

<llo_original>
// kernel: tpu_custom_call.1
$region0: #{tpu_custom_call.1}
  #allocation0 [shape = 'u32[]', space=smem, size = 0x4, offset = 0x4, fixed_abs, tag = 'smem constant byte address 0x4 - core index']
  #allocation1 [shape = 'u32[72,128]{1,0:T(1,128)}', space=vmem, size = 0x9000, scoped, tag = 'internal scratch']
  %s0 = inlined_call_operand.vmem [shape: f32[16,384], index: 0, kind: input, shape index: {}]
  %s1 = inlined_call_operand.vmem [shape: f32[384,32], index: 1, kind: input, shape index: {}]
  %s2 = inlined_call_operand.vmem [shape: f32[1,32], index: 2, kind: input, shape index: {}]
  %s3 = inlined_call_operand.hbm [shape: f32[16,32], index: 3, kind: output, shape index: {}]
  %s4 = sld [smem:[#allocation0]]
  $region22: #{tpu_custom_call.1} parent=0
    _
  %s6 = ssub.s32 1, %s4
  %s7 = scalar_select 0, %s6, %s4
  $region1: #{tpu_custom_call.1} parent=0
    #allocation2 [shape = 'u8[8192]{0}', space=vmem, size = 0x2000, scoped, tag = 'output window, operand 0, single buffered']
    #allocation3 [shape = 's32[1]{0}', space=sflag, size = 0x4, scoped, tag = 'scoped memory for tpu_custom_call.1']
    %8 = vsyncpa [#allocation3], 0
    // Predicated region
    $region2: #{tpu_custom_call.1} parent=1 // pred_check
      _
    $region3: #{tpu_custom_call.1} parent=1 // pred_check_branch
      %10 = sbr.rel (0) target = $region5
    $region4: #{tpu_custom_call.1} parent=1 // pred_region
      _
    $region5: #{tpu_custom_call.1} parent=1 // pred_fallthru
      _
    // Predicated region
    $region6: #{tpu_custom_call.1} parent=1 // pred_check
      _
    $region7: #{tpu_custom_call.1} parent=1 // pred_check_branch
      %12 = sbr.rel (0) target = $region9
    $region8: #{tpu_custom_call.1} parent=1 // pred_region
      _
    $region9: #{tpu_custom_call.1} parent=1 // pred_fallthru
      _
    // Predicated region
    $region10: #{tpu_custom_call.1} parent=1 // pred_check
      _
    $region11: #{tpu_custom_call.1} parent=1 // pred_check_branch
      %14 = sbr.rel (0) target = $region13
    $region12: #{tpu_custom_call.1} parent=1 // pred_region
      _
    $region13: #{tpu_custom_call.1} parent=1 // pred_fallthru
      _
    %v15 = vld [vmem:[%s0] sm:$0xff]
    %v16 = vld [vmem:[%s0 + $0x8] sm:$0xff]
    %v17 = vld [vmem:[%s0 + $0x10] sm:$0xff]
    %v18 = vld [vmem:[%s0 + $0x18] sm:$0xff]
    %v19 = vld [vmem:[%s0 + $0x20] sm:$0xff]
    %v20 = vld [vmem:[%s0 + $0x28] sm:$0xff]
    %v21 = vld [vmem:[%s1] sm:$0xff]
    %v22 = vld [vmem:[%s1 + $0x8] sm:$0xff]
    %v23 = vld [vmem:[%s1 + $0x10] sm:$0xff]
    %v24 = vld [vmem:[%s1 + $0x18] sm:$0xff]
    %v25 = vld [vmem:[%s1 + $0x20] sm:$0xff]
    %v26 = vld [vmem:[%s1 + $0x28] sm:$0xff]
    %v27 = vld [vmem:[%s1 + $0x30] sm:$0xff]
    %v28 = vld [vmem:[%s1 + $0x38] sm:$0xff]
    %v29 = vld [vmem:[%s1 + $0x40] sm:$0xff]
    %v30 = vld [vmem:[%s1 + $0x48] sm:$0xff]
    %v31 = vld [vmem:[%s1 + $0x50] sm:$0xff]
    %v32 = vld [vmem:[%s1 + $0x58] sm:$0xff]
    %v33 = vld [vmem:[%s1 + $0x60] sm:$0xff]
    %v34 = vld [vmem:[%s1 + $0x68] sm:$0xff]
    %v35 = vld [vmem:[%s1 + $0x70] sm:$0xff]
    %v36 = vld [vmem:[%s1 + $0x78] sm:$0xff]
    %v37 = vld [vmem:[%s1 + $0x80] sm:$0xff]
    %v38 = vld [vmem:[%s1 + $0x88] sm:$0xff]
    %v39 = vld [vmem:[%s1 + $0x90] sm:$0xff]
    %v40 = vld [vmem:[%s1 + $0x98] sm:$0xff]
    %v41 = vld [vmem:[%s1 + $0xa0] sm:$0xff]
    %v42 = vld [vmem:[%s1 + $0xa8] sm:$0xff]
    %v43 = vld [vmem:[%s1 + $0xb0] sm:$0xff]
    %v44 = vld [vmem:[%s1 + $0xb8] sm:$0xff]
    %v45 = vld [vmem:[%s1 + $0xc0] sm:$0xff]
    %v46 = vld [vmem:[%s1 + $0xc8] sm:$0xff]
    %v47 = vld [vmem:[%s1 + $0xd0] sm:$0xff]
    %v48 = vld [vmem:[%s1 + $0xd8] sm:$0xff]
    %v49 = vld [vmem:[%s1 + $0xe0] sm:$0xff]
    %v50 = vld [vmem:[%s1 + $0xe8] sm:$0xff]
    %v51 = vld [vmem:[%s1 + $0xf0] sm:$0xff]
    %v52 = vld [vmem:[%s1 + $0xf8] sm:$0xff]
    %v53 = vld [vmem:[%s1 + $0x100] sm:$0xff]
    %v54 = vld [vmem:[%s1 + $0x108] sm:$0xff]
    %v55 = vld [vmem:[%s1 + $0x110] sm:$0xff]
    %v56 = vld [vmem:[%s1 + $0x118] sm:$0xff]
    %v57 = vld [vmem:[%s1 + $0x120] sm:$0xff]
    %v58 = vld [vmem:[%s1 + $0x128] sm:$0xff]
    %v59 = vld [vmem:[%s1 + $0x130] sm:$0xff]
    %v60 = vld [vmem:[%s1 + $0x138] sm:$0xff]
    %v61 = vld [vmem:[%s1 + $0x140] sm:$0xff]
    %v62 = vld [vmem:[%s1 + $0x148] sm:$0xff]
    %v63 = vld [vmem:[%s1 + $0x150] sm:$0xff]
    %v64 = vld [vmem:[%s1 + $0x158] sm:$0xff]
    %v65 = vld [vmem:[%s1 + $0x160] sm:$0xff]
    %v66 = vld [vmem:[%s1 + $0x168] sm:$0xff]
    %v67 = vld [vmem:[%s1 + $0x170] sm:$0xff]
    %v68 = vld [vmem:[%s1 + $0x178] sm:$0xff]
    %v69 = vld [vmem:[%s2] sm:$0x1]
    %v71 = vperm.slane %v69, 0
    %73 = vmatpush.msra.mxu0 %v36
    %74 = vmatpush.msra.mxu0 %v35
    %75 = vmatpush.msra.mxu0 %v34
    %76 = vmatpush.msra.mxu0 %v33
    %77 = vmatpush.msra.mxu0 %v32
    %78 = vmatpush.msra.mxu0 %v31
    %79 = vmatpush.msra.mxu0 %v30
    %80 = vmatpush.msra.mxu0 %v29
    %81 = vmatpush.msra.mxu0 %v28
    %82 = vmatpush.msra.mxu0 %v27
    %83 = vmatpush.msra.mxu0 %v26
    %84 = vmatpush.msra.mxu0 %v25
    %85 = vmatpush.msra.mxu0 %v24
    %86 = vmatpush.msra.mxu0 %v23
    %87 = vmatpush.msra.mxu0 %v22
    %88 = vmatpush.msra.mxu0 %v21
    %89 = vmatmul.f32.gmra.mxu0 %v15
    %v90 = vpop.f32.mrf.mxu0
    %v91 = vadd.f32 %v71, %v90
    %92 = vmatmul.f32.gmra.mxu0 %v18
    %v93 = vpop.f32.mrf.mxu0
    %v94 = vadd.f32 %v71, %v93
    %95 = vdwg.mxu0
    %96 = vmatpush.msra.mxu0 %v52
    %97 = vmatpush.msra.mxu0 %v51
    %98 = vmatpush.msra.mxu0 %v50
    %99 = vmatpush.msra.mxu0 %v49
    %100 = vmatpush.msra.mxu0 %v48
    %101 = vmatpush.msra.mxu0 %v47
    %102 = vmatpush.msra.mxu0 %v46
    %103 = vmatpush.msra.mxu0 %v45
    %104 = vmatpush.msra.mxu0 %v44
    %105 = vmatpush.msra.mxu0 %v43
    %106 = vmatpush.msra.mxu0 %v42
    %107 = vmatpush.msra.mxu0 %v41
    %108 = vmatpush.msra.mxu0 %v40
    %109 = vmatpush.msra.mxu0 %v39
    %110 = vmatpush.msra.mxu0 %v38
    %111 = vmatpush.msra.mxu0 %v37
    %112 = vmatmul.f32.gmra.mxu0 %v16
    %v113 = vpop.f32.mrf.mxu0
    %v114 = vadd.f32 %v91, %v113
    %115 = vmatmul.f32.gmra.mxu0 %v19
    %v116 = vpop.f32.mrf.mxu0
    %v117 = vadd.f32 %v94, %v116
    %118 = vdwg.mxu0
    %119 = vmatpush.msra.mxu0 %v68
    %120 = vmatpush.msra.mxu0 %v67
    %121 = vmatpush.msra.mxu0 %v66
    %122 = vmatpush.msra.mxu0 %v65
    %123 = vmatpush.msra.mxu0 %v64
    %124 = vmatpush.msra.mxu0 %v63
    %125 = vmatpush.msra.mxu0 %v62
    %126 = vmatpush.msra.mxu0 %v61
    %127 = vmatpush.msra.mxu0 %v60
    %128 = vmatpush.msra.mxu0 %v59
    %129 = vmatpush.msra.mxu0 %v58
    %130 = vmatpush.msra.mxu0 %v57
    %131 = vmatpush.msra.mxu0 %v56
    %132 = vmatpush.msra.mxu0 %v55
    %133 = vmatpush.msra.mxu0 %v54
    %134 = vmatpush.msra.mxu0 %v53
    %135 = vmatmul.f32.gmra.mxu0 %v17
    %v136 = vpop.f32.mrf.mxu0
    %v137 = vadd.f32 %v114, %v136
    %138 = vmatmul.f32.gmra.mxu0 %v20
    %v139 = vpop.f32.mrf.mxu0
    %v140 = vadd.f32 %v117, %v139
    %141 = vdwg.mxu0
    %vm142 = vcmask 261120
    %143 = vst.msk [vmem:[#allocation2] sm:$0xff] %vm142, %v137
    %144 = vst.msk [vmem:[#allocation2 + $0x8] sm:$0xff] %vm142, %v140
    // Predicated region
    $region14: #{tpu_custom_call.1} parent=1 // pred_check
      _
    $region15: #{tpu_custom_call.1} parent=1 // pred_check_branch
      %146 = sbr.rel (0) target = $region17
    $region16: #{tpu_custom_call.1} parent=1 // pred_region
      %148 = vsyncadd [#allocation3], 0
      %s149 = sshll.u32 [#allocation2], 4
      %s150 = int_to_ptr.vmem [resolvable:$true] %s149
      %s151 = sshll.u32 %s3, 4
      %s152 = int_to_ptr.hbm [resolvable:$true] %s151
      %157 = dma.vmem_to_hbm [thread:$0]  %s150, 256, %s152, [#allocation3], 128, 128, 8
    $region17: #{tpu_custom_call.1} parent=1 // pred_fallthru
      _
    // Predicated region
    $region18: #{tpu_custom_call.1} parent=1 // pred_check
      _
    $region19: #{tpu_custom_call.1} parent=1 // pred_check_branch
      %159 = sbr.rel (0) target = $region21
    $region20: #{tpu_custom_call.1} parent=1 // pred_region
      %161 = dma.done [#allocation3], 256
    $region21: #{tpu_custom_call.1} parent=1 // pred_fallthru
      _
    %162 = vsyncpa [#allocation3], 1

</llo_original>
